<compile_context>
chip_gen: v7x
topology: tpu7x:2x2x1
jax: 0.10.0
libtpu: 0.0.40
codegen_flags: <defaults>
</compile_context>

<pallas_src>
import functools
import math

import jax
import jax.numpy as jnp
from jax.experimental import pallas as pl
from jax.experimental.pallas import tpu as pltpu

NUM_HEADS = 4


# ---------------------------------------------------------------------------
# Kernels (each handles a (B_TILE, C, E) batch-slab per grid step)
# ---------------------------------------------------------------------------
def _gnn_mean_kernel(x_ref, w_ref, b_ref, o_ref):
    """indicator 0: out[b, c] = mean_c(x[b]) @ W_gnn + B_gnn (same for all c).

    Reduce-before-matmul: the MXU sees a (B_TILE, E) operand instead of
    (B_TILE*C, E); the result is broadcast back to the C rows on store.
    """
    x = x_ref[...]                                                   # (BT, C, E) f32
    m = jnp.mean(x, axis=1)                                          # (BT, E)    f32
    y = jnp.dot(m.astype(jnp.bfloat16), w_ref[...],
                preferred_element_type=jnp.float32) + b_ref[...]     # (BT, Eout) f32
    o_ref[...] = jnp.broadcast_to(y[:, None, :], o_ref.shape).astype(o_ref.dtype)


def _gnn_cat_kernel(x_ref, wd_ref, w2_ref, b_ref, o_ref):
    """indicator 1: neighbor = rowsum_C(x) - x, so
        out = x @ (W1 - W2) + rowsum_C(x) @ W2 + b.
    wd_ref holds (W1 - W2) precomputed on the host; the second matmul works on
    the (B_TILE, E) rowsum slab instead of (B_TILE*C, E)."""
    x = x_ref[...]                                                   # (BT, C, E) f32
    bt, chan, e = x.shape
    s = jnp.sum(x, axis=1)                                           # (BT, E)
    y1 = jnp.dot(x.reshape(bt * chan, e).astype(jnp.bfloat16), wd_ref[...],
                 preferred_element_type=jnp.float32) + b_ref[...]    # (BT*C, Eout)
    y2 = jnp.dot(s.astype(jnp.bfloat16), w2_ref[...],
                 preferred_element_type=jnp.float32)                 # (BT, Eout)
    eo = y1.shape[-1]
    o_ref[...] = (y1.reshape(bt, chan, eo) + y2[:, None, :]).astype(o_ref.dtype)


def _attn_gnn_kernel(x_ref, wq_ref, wk_ref, bq_ref, bk_ref, wg_ref, bg_ref, o_ref,
                     *, num_heads):
    """indicator 2, fully fused per batch-slab:
        q/k in-projection (bf16 MXU, f32 accumulate)
        -> heads stacked along the row axis with an iota-generated lane mask
        -> one batched score matmul + one softmax per slab
        -> head-averaged attention weights (VMEM/vreg resident)
        -> out = (attn @ x) @ W_gnn + B_gnn.
    The MHA attention output `a`, value path and out-projection are dead in the
    module forward and are not computed."""
    x = x_ref[...]                                                   # (BT, C, E) f32
    bt, chan, embed = x.shape
    head_dim = embed // num_heads
    rows = num_heads * chan
    scale = 1.0 / math.sqrt(head_dim)

    xf = x.reshape(bt * chan, embed).astype(jnp.bfloat16)
    q = (jnp.dot(xf, wq_ref[...], preferred_element_type=jnp.float32)
         + bq_ref[...]) * scale                                      # (BT*C, E) f32
    k = jnp.dot(xf, wk_ref[...], preferred_element_type=jnp.float32) + bk_ref[...]
    q3 = q.reshape(bt, chan, embed)
    k3 = k.reshape(bt, chan, embed)

    # Stack the heads along the row (sublane) axis: row h*C + c of every batch
    # element holds q[c] masked to head h's lanes, so a single batched matmul
    # and softmax cover all heads. Mask built from iota compares (no HBM input).
    q_stack = jnp.concatenate([q3] * num_heads, axis=1)              # (BT, H*C, E)
    row_i = jax.lax.broadcasted_iota(jnp.int32, (bt, rows, embed), 1).astype(jnp.float32)
    col_i = jax.lax.broadcasted_iota(jnp.int32, (bt, rows, embed), 2).astype(jnp.float32)
    head_of_row = jnp.floor((row_i + 0.5) * (1.0 / chan))
    head_of_col = jnp.floor((col_i + 0.5) * (1.0 / head_dim))
    q_stack = jnp.where(head_of_row == head_of_col, q_stack, 0.0)

    # Scores: batched contraction on the embedding dim (no materialized k^T).
    # Kept in f32: tiny vs the projections and softmax-sensitive.
    s = jax.lax.dot_general(q_stack, k3,
                            dimension_numbers=(((2,), (2,)), ((0,), (0,))),
                            preferred_element_type=jnp.float32)      # (BT, H*C, C)
    s = s - jnp.max(s, axis=-1, keepdims=True)
    p = jnp.exp(s)
    # EUP reciprocal; the 1/num_heads of the head-average is folded into it.
    p = p * pl.reciprocal(jnp.sum(p, axis=-1, keepdims=True) * num_heads,
                          approx=True)
    attn = p[:, 0:chan, :]
    for h in range(1, num_heads):                                    # static, H == 4
        attn = attn + p[:, h * chan:(h + 1) * chan, :]               # (BT, C, C) averaged

    # Aggregate neighbours with the averaged weights: (BT,C,C) @ (BT,C,E).
    agg = jax.lax.dot_general(attn, x,
                              dimension_numbers=(((2,), (1,)), ((0,), (0,))),
                              preferred_element_type=jnp.float32)    # (BT, C, E)
    o = jnp.dot(agg.reshape(bt * chan, embed).astype(jnp.bfloat16), wg_ref[...],
                preferred_element_type=jnp.float32) + bg_ref[...]    # (BT*C, Eout)
    o_ref[...] = o.reshape(bt, chan, -1).astype(o_ref.dtype)


# ---------------------------------------------------------------------------
# pallas_call wrapper: batch-tiled grid, weights resident across grid steps
# ---------------------------------------------------------------------------
def _resident_spec(arr):
    zeros = (0,) * arr.ndim
    return pl.BlockSpec(arr.shape, lambda i, _z=zeros: _z)


def _pick_batch_tile(batch, chan, e_in, e_out, target_rows=512):
    """Largest divisor of `batch` whose row-slab stays near the ~512-row sweet
    spot and (x + out, double-buffered, f32) stays well inside scoped VMEM."""
    bytes_per_row = 4 * (e_in + e_out) * 2
    cap = max(chan, min(target_rows, (8 << 20) // max(bytes_per_row, 1)))
    best = 1
    for d in range(1, batch + 1):
        if batch % d == 0 and d * chan <= cap:
            best = d
    return best


def _fused_call(kernel, x3, params, eout, b_tile):
    batch, chan, e_in = x3.shape
    grid = (batch // b_tile,)
    in_specs = [pl.BlockSpec((b_tile, chan, e_in), lambda i: (i, 0, 0))]
    in_specs += [_resident_spec(p) for p in params]
    out_specs = pl.BlockSpec((b_tile, chan, eout), lambda i: (i, 0, 0))
    return pl.pallas_call(
        kernel,
        out_shape=jax.ShapeDtypeStruct((batch, chan, eout), jnp.float32),
        grid=grid,
        in_specs=in_specs,
        out_specs=out_specs,
        compiler_params=pltpu.CompilerParams(
            dimension_semantics=("parallel",),
            vmem_limit_bytes=32 * 1024 * 1024),
    )(x3, *params)


# ---------------------------------------------------------------------------
# Parameter construction (deterministic, mirrors nn.Module __init__)
# ---------------------------------------------------------------------------
def xavier_uniform(key, shape):
    bound = math.sqrt(6.0 / (shape[0] + shape[1]))
    return jax.random.uniform(key, shape, jnp.float32, -bound, bound)


class GNN:
    def __init__(self, input_feat, output_feat, indicator, key):
        E_in = input_feat * 7
        E_out = output_feat * 7
        assert E_out % NUM_HEADS == 0
        ks = jax.random.split(key, 8)
        self.W_gnn = xavier_uniform(ks[0], (E_in, E_out))
        self.W_gnn2 = xavier_uniform(ks[1], (E_in, E_out))            # dead in forward
        self.B_gnn2d = jax.random.normal(ks[2], (E_out,), jnp.float32).reshape(1, -1)
        self.W_cat = xavier_uniform(ks[3], (2 * E_in, E_out))
        self.B_cat2d = jax.random.normal(ks[4], (E_out,), jnp.float32).reshape(1, -1)
        self.W_att = xavier_uniform(ks[5], (2 * E_out, 1))             # dead in forward
        # MultiheadAttention in-projection (embed_dim = E_out; the module is only
        # valid when E_in == E_out). Only q/k are live in the forward.
        in_proj_w = xavier_uniform(ks[6], (3 * E_out, E_out))          # PyTorch (3E, E)
        in_proj_b = jnp.zeros((3 * E_out,), jnp.float32)               # PyTorch zero-inits
        self.wq_t = jnp.transpose(in_proj_w[:E_out, :])                # (E, E)
        self.wk_t = jnp.transpose(in_proj_w[E_out:2 * E_out, :])
        self.bq = in_proj_b[:E_out].reshape(1, -1)
        self.bk = in_proj_b[E_out:2 * E_out].reshape(1, -1)
        # bf16 copies feeding the MXU (fast path on v6e/v7x, f32 accumulation).
        self.W_gnn_bf = self.W_gnn.astype(jnp.bfloat16)
        self.Wd_bf = (self.W_cat[:E_in, :] - self.W_cat[E_in:, :]).astype(jnp.bfloat16)
        self.W2_bf = self.W_cat[E_in:, :].astype(jnp.bfloat16)
        self.wq_t_bf = self.wq_t.astype(jnp.bfloat16)
        self.wk_t_bf = self.wk_t.astype(jnp.bfloat16)
        self.indicator = indicator
        self.output_feat = output_feat
        self.E_in = E_in
        self.E_out = E_out

    def __call__(self, x):
        B, T, C, F = x.shape
        assert C == 8, "reference module's adjacency is 8x8"
        assert T * F == self.E_in
        # TODO(synk): fold this (0,2,1,3) layout transform (and its inverse on the
        # output) into the kernel via a BlockSpec over (B, C) with (1,T,1,F) blocks
        # to save 2 extra HBM passes at large sizes.
        x3 = jnp.transpose(x, (0, 2, 1, 3)).reshape(B, C, self.E_in)   # (B, C, E_in)
        b_tile = _pick_batch_tile(B, C, self.E_in, self.E_out)
        if self.indicator == 0:
            out = _fused_call(_gnn_mean_kernel, x3,
                              (self.W_gnn_bf, self.B_gnn2d), self.E_out, b_tile)
        elif self.indicator == 1:
            out = _fused_call(_gnn_cat_kernel, x3,
                              (self.Wd_bf, self.W2_bf, self.B_cat2d),
                              self.E_out, b_tile)
        else:
            assert self.E_in == self.E_out, "MHA requires input_feat == output_feat"
            kern = functools.partial(_attn_gnn_kernel, num_heads=NUM_HEADS)
            out = _fused_call(kern, x3,
                              (self.wq_t_bf, self.wk_t_bf, self.bq, self.bk,
                               self.W_gnn_bf, self.B_gnn2d),
                              self.E_out, b_tile)
        out = out.reshape(B, C, T, -1)
        return jnp.transpose(out, (0, 2, 1, 3))                        # (B, T, C, F_out)


# ---------------------------------------------------------------------------
# Pure-jnp f32 reference of the PyTorch forward (correctness check)
# ---------------------------------------------------------------------------
_PREC = jax.lax.Precision.HIGHEST


def _reference_forward(model, x):
    B, T, C, F = x.shape
    xr = jnp.transpose(x, (0, 2, 1, 3)).reshape(B, C, T * F)
    E = model.E_out
    if model.indicator == 0:
        adj2 = jnp.ones((B, C, C), jnp.float32) / C
        h = jnp.matmul(jnp.einsum("bij,bje->bie", adj2, xr, precision=_PREC),
                       model.W_gnn, precision=_PREC) + model.B_gnn2d
    elif model.indicator == 1:
        nadj = jnp.ones((C, C), jnp.float32) - jnp.eye(C, dtype=jnp.float32)
        nx = jnp.einsum("ij,bje->bie", nadj, xr, precision=_PREC)
        h = jnp.matmul(jnp.concatenate([xr, nx], axis=-1),
                       model.W_cat, precision=_PREC) + model.B_cat2d
    else:
        hd = E // NUM_HEADS
        q = (jnp.matmul(xr, model.wq_t, precision=_PREC) + model.bq) / math.sqrt(hd)
        k = jnp.matmul(xr, model.wk_t, precision=_PREC) + model.bk
        qh = q.reshape(B, C, NUM_HEADS, hd).transpose(0, 2, 1, 3)
        kh = k.reshape(B, C, NUM_HEADS, hd).transpose(0, 2, 1, 3)
        s = jnp.einsum("bhqd,bhkd->bhqk", qh, kh, precision=_PREC)
        p = jax.nn.softmax(s, axis=-1)
        b_attn = jnp.mean(p, axis=1)                                   # head-averaged
        h = jnp.matmul(jnp.einsum("bij,bje->bie", b_attn, xr, precision=_PREC),
                       model.W_gnn, precision=_PREC) + model.B_gnn2d
    h = h.reshape(B, C, T, -1)
    return jnp.transpose(h, (0, 2, 1, 3))


# ---------------------------------------------------------------------------
if __name__ == "__main__":
    key = jax.random.PRNGKey(0)
    k_param, k_data = jax.random.split(key)

    # Shapes implied by the forward: C must be 8 (8x8 adjacency), E = T*F =
    # input_feat*7, and the MHA path needs input_feat == output_feat.
    T, C, F = 4, 8, 7
    input_feat = output_feat = 4            # E = 28, 4 heads of 7
    # B=2 exercises the small single-step case; B=128 exercises a multi-step
    # "parallel" grid (64-batch tiles -> 2 grid steps).
    for B in (2, 128):
        x = jax.random.normal(jax.random.fold_in(k_data, B), (B, T, C, F), jnp.float32)
        for indicator in (0, 1, 2):
            model = GNN(input_feat, output_feat, indicator, k_param)
            y = jax.block_until_ready(model(x))
            assert y.shape == (B, T, C, output_feat * 7 // T), y.shape
            assert bool(jnp.all(jnp.isfinite(y)))
            y_ref = jax.block_until_ready(_reference_forward(model, x))
            err = float(jnp.max(jnp.abs(y - y_ref)))
            # Tolerance sized for the bf16 MXU operands requested by the perf
            # review (reference is f32/HIGHEST).
            assert err < 5e-2, f"B={B} indicator={indicator} max|diff|={err}"
    print("KERNEL_OK")
</pallas_src>

<mosaic_0001>
module attributes {stable_mosaic.version = 11 : i64} {
  func.func @_gnn_mean_kernel(%arg0: i32, %arg1: memref<2x8x28xf32, #tpu.memory_space<vmem>>, %arg2: memref<28x28xbf16, #tpu.memory_space<vmem>>, %arg3: memref<1x28xf32, #tpu.memory_space<vmem>>, %arg4: memref<2x8x28xf32, #tpu.memory_space<vmem>>) attributes {dimension_semantics = [#tpu.dimension_semantics<parallel>], iteration_bounds = array<i64: 1>, scalar_prefetch = 0 : i64, scratch_operands = 0 : i64, tpu.core_type = #tpu.core_type<tc>, window_params = [{transform_indices = @transform_0, window_bounds = array<i64: 2, 8, 28>}, {pipeline_mode = #tpu.pipeline_mode<synchronous>, transform_indices = @transform_1, window_bounds = array<i64: 28, 28>}, {pipeline_mode = #tpu.pipeline_mode<synchronous>, transform_indices = @transform_2, window_bounds = array<i64: 1, 28>}, {transform_indices = @transform_3, window_bounds = array<i64: 2, 8, 28>}]} {
    %c0 = arith.constant 0 : index
    %c0_0 = arith.constant 0 : index
    %c0_1 = arith.constant 0 : index
    %0 = vector.load %arg1[%c0, %c0_0, %c0_1] : memref<2x8x28xf32, #tpu.memory_space<vmem>>, vector<2x8x28xf32>
    %cst = arith.constant dense<0.000000e+00> : vector<2x28xf32>
    %1 = vector.multi_reduction <add>, %0, %cst [1] : vector<2x8x28xf32> to vector<2x28xf32>
    %cst_2 = arith.constant 8.000000e+00 : f32
    %2 = vector.broadcast %cst_2 : f32 to vector<2x28xf32>
    %3 = arith.divf %1, %2 : vector<2x28xf32>
    %4 = arith.truncf %3 : vector<2x28xf32> to vector<2x28xbf16>
    %c0_3 = arith.constant 0 : index
    %c0_4 = arith.constant 0 : index
    %5 = vector.load %arg2[%c0_3, %c0_4] : memref<28x28xbf16, #tpu.memory_space<vmem>>, vector<28x28xbf16>
    %cst_5 = arith.constant dense<0.000000e+00> : vector<2x28xf32>
    %6 = tpu.matmul %4, %5, %cst_5 {dimension_numbers = #tpu.dot_dimension_numbers<[1], [0], [0], [1], [0, 0, 1, 1], [], []>} : vector<2x28xbf16>, vector<28x28xbf16>, vector<2x28xf32> -> vector<2x28xf32>
    %c0_6 = arith.constant 0 : index
    %c0_7 = arith.constant 0 : index
    %7 = vector.load %arg3[%c0_6, %c0_7] : memref<1x28xf32, #tpu.memory_space<vmem>>, vector<1x28xf32>
    %8 = vector.broadcast %7 : vector<1x28xf32> to vector<2x28xf32>
    %9 = arith.addf %6, %8 : vector<2x28xf32>
    %10 = vector.shape_cast %9 : vector<2x28xf32> to vector<2x1x28xf32>
    %11 = vector.shape_cast %10 : vector<2x1x28xf32> to vector<2x1x28xf32>
    %12 = vector.broadcast %11 : vector<2x1x28xf32> to vector<2x8x28xf32>
    %c0_8 = arith.constant 0 : index
    %c0_9 = arith.constant 0 : index
    %c0_10 = arith.constant 0 : index
    %13 = vector.load %arg4[%c0_8, %c0_9, %c0_10] : memref<2x8x28xf32, #tpu.memory_space<vmem>>, vector<2x8x28xf32>
    tpu.vector_store %arg4[%c0_8, %c0_9, %c0_10], %12 {strides = array<i32>} : memref<2x8x28xf32, #tpu.memory_space<vmem>>, vector<2x8x28xf32>,
    return
  }
  func.func @transform_0(%arg0: i32) -> (i32, i32, i32) {
    %c0_i32 = arith.constant 0 : i32
    %c0_i32_0 = arith.constant 0 : i32
    %c0_i32_1 = arith.constant 0 : i32
    return %arg0, %c0_i32, %c0_i32_0 : i32, i32, i32
  }
  func.func @transform_1(%arg0: i32) -> (i32, i32) {
    %c0_i32 = arith.constant 0 : i32
    %c0_i32_0 = arith.constant 0 : i32
    %c0_i32_1 = arith.constant 0 : i32
    return %c0_i32, %c0_i32_0 : i32, i32
  }
  func.func @transform_2(%arg0: i32) -> (i32, i32) {
    %c0_i32 = arith.constant 0 : i32
    %c0_i32_0 = arith.constant 0 : i32
    %c0_i32_1 = arith.constant 0 : i32
    return %c0_i32, %c0_i32_0 : i32, i32
  }
  func.func @transform_3(%arg0: i32) -> (i32, i32, i32) {
    %c0_i32 = arith.constant 0 : i32
    %c0_i32_0 = arith.constant 0 : i32
    %c0_i32_1 = arith.constant 0 : i32
    return %arg0, %c0_i32, %c0_i32_0 : i32, i32, i32
  }
}

</mosaic_0001>

<llo_original>
// kernel: tpu_custom_call.1
$region0: #{tpu_custom_call.1}
  #allocation0 [shape = 'u32[]', space=smem, size = 0x4, offset = 0x4, fixed_abs, tag = 'smem constant byte address 0x4 - core index']
  #allocation1 [shape = 'u32[144,128]{1,0:T(1,128)}', space=vmem, size = 0x12000, scoped, tag = 'internal scratch']
  %s0 = inlined_call_operand.hbm [shape: f32[2,8,28], index: 0, kind: input, shape index: {}]
  %s1 = inlined_call_operand.hbm [shape: bf16[28,28], index: 1, kind: input, shape index: {}]
  %s2 = inlined_call_operand.vmem [shape: f32[1,28], index: 2, kind: input, shape index: {}]
  %s3 = inlined_call_operand.hbm [shape: f32[2,8,28], index: 3, kind: output, shape index: {}]
  %s4 = sld [smem:[#allocation0]]
  $region30: #{tpu_custom_call.1} parent=0
    _
  %s6 = ssub.s32 1, %s4
  %s7 = scalar_select 0, %s6, %s4
  $region1: #{tpu_custom_call.1} parent=0
    #allocation2 [shape = 'u8[8192]{0}', space=vmem, size = 0x2000, scoped, tag = 'input window, operand 0, single buffered']
    #allocation3 [shape = 's32[1]{0}', space=sflag, size = 0x4, scoped, tag = 'scoped memory for tpu_custom_call.1']
    #allocation4 [shape = 's32[1]{0}', space=sflag, size = 0x4, scoped, tag = 'scoped memory for tpu_custom_call.1']
    #allocation5 [shape = 'u8[8192]{0}', space=vmem, size = 0x2000, scoped, tag = 'input window, operand 1, single buffered']
    #allocation6 [shape = 's32[1]{0}', space=sflag, size = 0x4, scoped, tag = 'scoped memory for tpu_custom_call.1']
    #allocation7 [shape = 'u8[8192]{0}', space=vmem, size = 0x2000, scoped, tag = 'output window, operand 0, single buffered']
    %8 = vsyncpa [#allocation3], 0
    %9 = vsyncpa [#allocation6], 0
    %10 = vsyncpa [#allocation4], 0
    // Predicated region
    $region2: #{tpu_custom_call.1} parent=1 // pred_check
      _
    $region3: #{tpu_custom_call.1} parent=1 // pred_check_branch
      %12 = sbr.rel (0) target = $region5
    $region4: #{tpu_custom_call.1} parent=1 // pred_region
      %s14 = ssub.s32 256, 256
      %15 = vsyncadd [#allocation3], %s14
      %s16 = sshll.u32 [#allocation2], 4
      %s17 = int_to_ptr.vmem [resolvable:$true] %s16
      %22 = dma.hbm_to_vmem [thread:$0]  %s0, 256, %s17, [#allocation3], 128, 128, 8
    $region5: #{tpu_custom_call.1} parent=1 // pred_fallthru
      _
    // Predicated region
    $region6: #{tpu_custom_call.1} parent=1 // pred_check
      _
    $region7: #{tpu_custom_call.1} parent=1 // pred_check_branch
      %24 = sbr.rel (0) target = $region9
    $region8: #{tpu_custom_call.1} parent=1 // pred_region
      %s26 = ssub.s32 256, 256
      %27 = vsyncadd [#allocation6], %s26
      %s28 = sshll.u32 [#allocation5], 4
      %s29 = int_to_ptr.vmem [resolvable:$true] %s28
      %34 = dma.hbm_to_vmem [thread:$0]  %s1, 256, %s29, [#allocation6], 64, 64, 4
    $region9: #{tpu_custom_call.1} parent=1 // pred_fallthru
      _
    // Predicated region
    $region10: #{tpu_custom_call.1} parent=1 // pred_check
      _
    $region11: #{tpu_custom_call.1} parent=1 // pred_check_branch
      %36 = sbr.rel (0) target = $region13
    $region12: #{tpu_custom_call.1} parent=1 // pred_region
      _
    $region13: #{tpu_custom_call.1} parent=1 // pred_fallthru
      _
    // Predicated region
    $region14: #{tpu_custom_call.1} parent=1 // pred_check
      _
    $region15: #{tpu_custom_call.1} parent=1 // pred_check_branch
      %38 = sbr.rel (0) target = $region17
    $region16: #{tpu_custom_call.1} parent=1 // pred_region
      %39 = dma.done [#allocation3], 256
    $region17: #{tpu_custom_call.1} parent=1 // pred_fallthru
      _
    // Predicated region
    $region18: #{tpu_custom_call.1} parent=1 // pred_check
      _
    $region19: #{tpu_custom_call.1} parent=1 // pred_check_branch
      %41 = sbr.rel (0) target = $region21
    $region20: #{tpu_custom_call.1} parent=1 // pred_region
      %42 = dma.done [#allocation6], 256
    $region21: #{tpu_custom_call.1} parent=1 // pred_fallthru
      _
    %v44 = vld [vmem:[#allocation2] sm:$0xff]
    %v45 = vld [vmem:[#allocation2 + $0x8] sm:$0xff]
    %vm46 = vcmask 228352
    %v47 = vsel %vm46, %v44, 0.0
    %v48 = vrot.slane %v47, 4
    %v49 = vadd.f32 %v47, %v48
    %v50 = vrot.slane %v49, 2
    %v51 = vadd.f32 %v49, %v50
    %v52 = vrot.slane %v51, 1
    %v53 = vadd.f32 %v51, %v52
    %v54 = vsel %vm46, %v45, 0.0
    %v55 = vrot.slane %v54, 4
    %v56 = vadd.f32 %v54, %v55
    %v57 = vrot.slane %v56, 2
    %v58 = vadd.f32 %v56, %v57
    %v59 = vrot.slane %v58, 1
    %v60 = vadd.f32 %v58, %v59
    %v61 = vrcp.pop 8.0
    %v62 = vmul.f32 %v53, %v61
    %v63 = vmul.f32 %v60, %v61
    %v64 = vpack.c.bf16 %v62, %v62
    %v65 = vpack.c.bf16 %v63, %v63
    %v66 = vld [vmem:[#allocation5] sm:$0xf]
    %v67 = vld [vmem:[#allocation5 + $0x4] sm:$0xf]
    %v68 = vld [vmem:[#allocation5 + $0x8] sm:$0xf]
    %v69 = vld [vmem:[#allocation5 + $0xc] sm:$0x3]
    %v70 = vld [vmem:[%s2] sm:$0x1]
    %v72 = vlaneseq
    %v73 = vshrl.u32 %v72, 7
    %v74 = vsub.s32 0, %v73
    %v75 = vrot.slane %v70, %v74
    %v79 = vunpack.c.l.b16 %v64
    %v80 = vunpack.c.l.b16 %v65
    %vm81 = vcmask 1041409
    %v82 = vsel %vm81, %v80, %v79
    %v83 = vpack.c.b16 %v82, %v82
    %v88 = vunpack.c.l.b16 %v66
    %v89 = vunpack.c.l.b16 %v67
    %v90 = vunpack.c.l.b16 %v68
    %v91 = vunpack.c.l.b16 %v69
    %v92 = vpack.c.b16 %v89, %v88
    %v93 = vpack.c.b16 %v91, %v90
    %v96 = vsel %vm46, %v83, 0
    %vm98 = vcmask 1045504
    %v100 = vsel %vm98, %v93, 0
    %102 = vmatprep.subr.bf16.mxu0 0
    %103 = vmatpush1.bf16.msra.mxu0 %v92
    %104 = vmatprep.subr.bf16.mxu0 0
    %105 = vmatpush1.bf16.msra.mxu0 %v100
    %106 = vmatprep.subr.bf16.mxu0 0
    %107 = vmatpush1.bf16.msra.mxu0 0
    %108 = vmatprep.subr.bf16.mxu0 0
    %109 = vmatpush1.bf16.msra.mxu0 0
    %110 = vmatprep.subr.bf16.mxu0 0
    %111 = vmatpush1.bf16.msra.mxu0 0
    %112 = vmatprep.subr.bf16.mxu0 0
    %113 = vmatpush1.bf16.msra.mxu0 0
    %114 = vmatprep.subr.bf16.mxu0 0
    %115 = vmatpush1.bf16.msra.mxu0 0
    %116 = vmatprep.subr.bf16.mxu0 0
    %117 = vmatpush1.bf16.msra.mxu0 0
    %118 = vmatprep.subr.bf16.mxu0 0
    %119 = vmatpush1.bf16.msra.mxu0 0
    %120 = vmatprep.subr.bf16.mxu0 0
    %121 = vmatpush1.bf16.msra.mxu0 0
    %122 = vmatprep.subr.bf16.mxu0 0
    %123 = vmatpush1.bf16.msra.mxu0 0
    %124 = vmatprep.subr.bf16.mxu0 0
    %125 = vmatpush1.bf16.msra.mxu0 0
    %126 = vmatprep.subr.bf16.mxu0 0
    %127 = vmatpush1.bf16.msra.mxu0 0
    %128 = vmatprep.subr.bf16.mxu0 0
    %129 = vmatpush1.bf16.msra.mxu0 0
    %130 = vmatprep.subr.bf16.mxu0 0
    %131 = vmatpush1.bf16.msra.mxu0 0
    %132 = vmatprep.subr.bf16.mxu0 0
    %133 = vmatpush1.bf16.msra.mxu0 0
    %134 = vmatprep.mubr.bf16.mxu0 0
    %135 = vmatmul.mubr.bf16.gmra.mrb[0].mxu0 %v96
    %v136 = vpop.f32.mrb[0].mxu0
    %v137 = vadd.f32 %v75, %v136
    %v138 = vpop.f32.mrb[0].mxu0
    %v139 = vpop.f32.mrb[0].mxu0
    %v140 = vpop.f32.mrb[0].mxu0
    %141 = vdwg.mxu0
    %v144 = vunpack.c.l.s4 1966171168
    %v145 = vunpack.c.0.s8 %v144
    %v146 = vlaneseq
    %v147 = vshrl.u32 %v146, 7
    %v148 = vsub.s32 %v145, %v147
    %v149 = vrot.slane %v137, %v148
    %v150 = vcombine.high %v149, %v149
    %v152 = vunpack.c.l.s4 1966171168
    %v153 = vunpack.c.0.s8 %v152
    %v154 = vlaneseq
    %v155 = vshrl.u32 %v154, 7
    %v156 = vsub.s32 %v153, %v155
    %v157 = vrot.slane %v149, %v156
    %v159 = vunpack.c.l.s4 1966171168
    %v160 = vunpack.c.0.s8 %v159
    %v161 = vlaneseq
    %v162 = vshrl.u32 %v161, 7
    %v163 = vsub.s32 %v160, %v162
    %v164 = vrot.slane %v150, %v163
    %v165 = vlaneseq
    %v166 = vshrl.u32 %v165, 7
    %v167 = vsub.s32 0, %v166
    %v168 = vrot.slane %v157, %v167
    %v169 = vlaneseq
    %v170 = vshrl.u32 %v169, 7
    %v171 = vsub.s32 0, %v170
    %v172 = vrot.slane %v164, %v171
    %175 = vst.msk [vmem:[#allocation7] sm:$0xff] %vm46, %v168
    %176 = vst.msk [vmem:[#allocation7 + $0x8] sm:$0xff] %vm46, %v172
    // Predicated region
    $region22: #{tpu_custom_call.1} parent=1 // pred_check
      _
    $region23: #{tpu_custom_call.1} parent=1 // pred_check_branch
      %178 = sbr.rel (0) target = $region25
    $region24: #{tpu_custom_call.1} parent=1 // pred_region
      %s180 = ssub.s32 256, 256
      %181 = vsyncadd [#allocation4], %s180
      %s182 = sshll.u32 [#allocation7], 4
      %s183 = int_to_ptr.vmem [resolvable:$true] %s182
      %188 = dma.vmem_to_hbm [thread:$0]  %s183, 256, %s3, [#allocation4], 128, 128, 8
    $region25: #{tpu_custom_call.1} parent=1 // pred_fallthru
      _
    // Predicated region
    $region26: #{tpu_custom_call.1} parent=1 // pred_check
      _
    $region27: #{tpu_custom_call.1} parent=1 // pred_check_branch
      %190 = sbr.rel (0) target = $region29
    $region28: #{tpu_custom_call.1} parent=1 // pred_region
      %191 = dma.done [#allocation4], 256
    $region29: #{tpu_custom_call.1} parent=1 // pred_fallthru
      _
    %192 = vsyncpa [#allocation3], 1
    %193 = vsyncpa [#allocation6], 1
    %194 = vsyncpa [#allocation4], 1

</llo_original>
